<compile_context>
chip_gen: v6e
topology: v6e:2x2x1
jax: 0.10.0
libtpu: 0.0.40
codegen_flags: <defaults>
</compile_context>

<pallas_src>
import functools

import numpy as np
import jax
import jax.numpy as jnp
from jax import lax
from jax.experimental import pallas as pl
from jax.experimental.pallas import tpu as pltpu

GRAD_IS_ZERO = 1e-12

GAUSS_KER = [
    [0.000874, 0.006976, 0.01386, 0.006976, 0.000874],
    [0.006976, 0.0557, 0.110656, 0.0557, 0.006976],
    [0.01386, 0.110656, 0.219833, 0.110656, 0.01386],
    [0.006976, 0.0557, 0.110656, 0.0557, 0.006976],
    [0.000874, 0.006976, 0.01386, 0.006976, 0.000874],
]
GREY_W = (0.114, 0.587, 0.299)   # 1x1 conv weight over channels 0,1,2

LANE = 128
SUBLANE = 8


def _round_up(n, m):
    return ((n + m - 1) // m) * m


# ----------------------------------------------------------------------------
# in-kernel helpers
# ----------------------------------------------------------------------------
def _roll(x, shift, axis):
    # pltpu.roll with a guaranteed-nonnegative static shift (jnp.roll semantics)
    return pltpu.roll(x, shift % x.shape[axis], axis)


def _edge_masks(shape, H, W):
    # Hoisted boundary masks (built once per kernel invocation); masks use the
    # LOGICAL height/width even though `shape` is the padded plane.
    i = lax.broadcasted_iota(jnp.int32, shape, 0)
    j = lax.broadcasted_iota(jnp.int32, shape, 1)
    return i == 0, i == H - 1, j == 0, j == W - 1


def _sh_row_m1(x, first_row):   # y[i, :] = x[max(i - 1, 0), :]
    return jnp.where(first_row, x, _roll(x, 1, 0))


def _sh_row_p1(x, last_row):    # y[i, :] = x[min(i + 1, H - 1), :]
    return jnp.where(last_row, x, _roll(x, -1, 0))


def _sh_col_m1(x, first_col):   # y[:, j] = x[:, max(j - 1, 0)]
    return jnp.where(first_col, x, _roll(x, 1, 1))


def _sh_col_p1(x, last_col):    # y[:, j] = x[:, min(j + 1, W - 1)]
    return jnp.where(last_col, x, _roll(x, -1, 1))


def _recip(x):
    # approximate EUP reciprocal + one Newton step (near f32-exact, no divide)
    r = pl.reciprocal(x, approx=True)
    return r * (2.0 - x * r)


# ----------------------------------------------------------------------------
# Pallas kernels
# ----------------------------------------------------------------------------
def grey_gauss_kernel(x_ref, o_ref, *, H, W):
    # 1x1 grey conv over channels -> per-image min/max normalize to [0,255]
    # -> 5x5 Gaussian with ReplicationPad2d(2), all fused.
    c0 = x_ref[0, 0]
    c1 = x_ref[0, 1]
    c2 = x_ref[0, 2]
    g = GREY_W[0] * c0 + GREY_W[1] * c1 + GREY_W[2] * c2

    # edge-replication padding means min/max over the padded plane == logical.
    gmin = jnp.min(g)
    gmax = jnp.max(g)
    denom = gmax - gmin
    inv = jnp.where(denom != 0.0, 1.0 / denom, 0.0)   # tiny guard vs constant image
    g = (g - gmin) * inv * 255.0

    first_row, last_row, first_col, last_col = _edge_masks(g.shape, H, W)

    # 5x5 blur: +-2 shifts built by composing two +-1 replication shifts
    rp1 = _sh_row_p1(g, last_row)
    rp2 = _sh_row_p1(rp1, last_row)
    rm1 = _sh_row_m1(g, first_row)
    rm2 = _sh_row_m1(rm1, first_row)
    rows = (rm2, rm1, g, rp1, rp2)                    # row tap a -> shift a-2

    acc = jnp.zeros_like(g)
    for a in range(5):
        r = rows[a]
        cp1 = _sh_col_p1(r, last_col)
        cp2 = _sh_col_p1(cp1, last_col)
        cm1 = _sh_col_m1(r, first_col)
        cm2 = _sh_col_m1(cm1, first_col)
        cols = (cm2, cm1, r, cp1, cp2)                # col tap b -> shift b-2
        for b in range(5):
            acc = acc + GAUSS_KER[a][b] * cols[b]
    o_ref[0] = acc


def centered_grad_kernel(x_ref, dx_ref, dy_ref, *, H, W):
    # centered difference with replication padding: 0.5*(x[j+1]-x[j-1]) etc.
    g = x_ref[0]
    first_row, last_row, first_col, last_col = _edge_masks(g.shape, H, W)
    dx_ref[0] = 0.5 * (_sh_col_p1(g, last_col) - _sh_col_m1(g, first_col))
    dy_ref[0] = 0.5 * (_sh_row_p1(g, last_row) - _sh_row_m1(g, first_row))


def tv_warp_kernel(x1_ref, x2w_ref, dxw_ref, dyw_ref, u1_ref, u2_ref,
                   p11_ref, p12_ref, p21_ref, p22_ref, *out_refs,
                   theta, l_t, taut, eps, n_iters, H, W, with_rho):
    # Fused per-warp TV-L1 update: warp-prep + n_iters inner iterations.
    # The iteration state (u1,u2,p11..p22) lives in the output VMEM blocks so a
    # lax.fori_loop bounds live ranges; rho is only emitted when with_rho.
    u1o, u2o, p11o, p12o, p21o, p22o = out_refs[:6]
    rho_o = out_refs[6] if with_rho else None

    x1 = x1_ref[0]
    x2w = x2w_ref[0]
    dx = dxw_ref[0]
    dy = dyw_ref[0]

    first_row, last_row, first_col, last_col = _edge_masks(x1.shape, H, W)

    # warp-prep: loop-invariant quantities, hoisted out of the iteration loop
    grad = dx * dx + dy * dy + eps
    inv_grad = _recip(grad)
    ltg = l_t * grad
    has_grad = grad > eps
    u1_0 = u1_ref[0]
    u2_0 = u2_ref[0]
    rho_c = x2w - dx * u1_0 - dy * u2_0 - x1

    # initialize iteration state in the output blocks
    u1o[0] = u1_0
    u2o[0] = u2_0
    p11o[0] = p11_ref[0]
    p12o[0] = p12_ref[0]
    p21o[0] = p21_ref[0]
    p22o[0] = p22_ref[0]

    def body(_, carry):
        u1 = u1o[0]
        u2 = u2o[0]
        p11 = p11o[0]
        p12 = p12o[0]
        p21 = p21o[0]
        p22 = p22o[0]

        rho = rho_c + dx * u1 + dy * u2 + eps
        # the three thresholding cases are mutually exclusive -> nested selects
        scale = jnp.where(rho < -ltg, l_t,
                jnp.where(rho > ltg, -l_t,
                jnp.where(has_grad, -rho * inv_grad, 0.0)))
        v1 = scale * dx + u1
        v2 = scale * dy + u2

        # divergence (backward diff, replication pad -> 0 at first row/col)
        div1 = (p11 - _sh_col_m1(p11, first_col)) + (p12 - _sh_row_m1(p12, first_row))
        div2 = (p21 - _sh_col_m1(p21, first_col)) + (p22 - _sh_row_m1(p22, first_row))
        u1n = v1 + theta * div1
        u2n = v2 + theta * div2

        # forward gradient (replication pad -> 0 at last row/col)
        u1x = _sh_col_p1(u1n, last_col) - u1n
        u1y = _sh_row_p1(u1n, last_row) - u1n
        u2x = _sh_col_p1(u2n, last_col) - u2n
        u2y = _sh_row_p1(u2n, last_row) - u2n

        ng1 = 1.0 + taut * jnp.sqrt(u1x * u1x + u1y * u1y + eps)
        ng2 = 1.0 + taut * jnp.sqrt(u2x * u2x + u2y * u2y + eps)
        r1 = _recip(ng1)
        r2 = _recip(ng2)

        u1o[0] = u1n
        u2o[0] = u2n
        p11o[0] = (p11 + taut * u1x) * r1
        p12o[0] = (p12 + taut * u1y) * r1
        p21o[0] = (p21 + taut * u2x) * r2
        p22o[0] = (p22 + taut * u2y) * r2
        if with_rho:
            rho_o[0] = rho
        return carry

    lax.fori_loop(0, n_iters, body, 0)


# ----------------------------------------------------------------------------
# pallas_call wrappers (operate on padded (mult-8, mult-128) planes end-to-end)
# ----------------------------------------------------------------------------
@functools.lru_cache(maxsize=None)
def _vmem_limit():
    # per-generation VMEM budget (~85% of physical, clamped), with safe fallback
    try:
        cap = int(pltpu.get_tpu_info().vmem_capacity_bytes)
    except Exception:
        cap = 128 * 1024 * 1024
    return max(32 * 1024 * 1024, min(int(cap * 0.85), 110 * 1024 * 1024))


def _cparams():
    return pltpu.CompilerParams(dimension_semantics=("parallel",),
                                vmem_limit_bytes=_vmem_limit())


def _pad_hw(x, Hp, Wp):
    # edge-replication pad of the last two dims up to (Hp, Wp)
    H, W = x.shape[-2], x.shape[-1]
    if H == Hp and W == Wp:
        return x
    pads = [(0, 0)] * (x.ndim - 2) + [(0, Hp - H), (0, Wp - W)]
    return jnp.pad(x, pads, mode="edge")


def _plane_spec(Hp, Wp):
    return pl.BlockSpec((1, Hp, Wp), lambda b: (b, 0, 0))


def grey_gauss(x):
    # x: (B, 3, H, W) float32 -> smoothed normalized grey, PADDED (B, Hp, Wp)
    B, C, H, W = x.shape
    Hp, Wp = _round_up(H, SUBLANE), _round_up(W, LANE)
    xp = _pad_hw(x, Hp, Wp)
    out = pl.pallas_call(
        functools.partial(grey_gauss_kernel, H=H, W=W),
        out_shape=jax.ShapeDtypeStruct((B, Hp, Wp), jnp.float32),
        grid=(B,),
        in_specs=[pl.BlockSpec((1, C, Hp, Wp), lambda b: (b, 0, 0, 0))],
        out_specs=_plane_spec(Hp, Wp),
        compiler_params=_cparams(),
    )(xp)
    return out                                         # stays padded


def centered_grad(xp, H, W):
    # xp: padded (B, Hp, Wp) with logical region (H, W); outputs stay padded
    B, Hp, Wp = xp.shape
    spec = _plane_spec(Hp, Wp)
    dx, dy = pl.pallas_call(
        functools.partial(centered_grad_kernel, H=H, W=W),
        out_shape=tuple(jax.ShapeDtypeStruct((B, Hp, Wp), jnp.float32)
                        for _ in range(2)),
        grid=(B,),
        in_specs=[spec],
        out_specs=(spec, spec),
        compiler_params=_cparams(),
    )(xp)
    return dx, dy


def tv_warp(x1p, x2wp, dxwp, dywp, u1p, u2p, p11p, p12p, p21p, p22p, *,
            H, W, theta, l_t, taut, n_iters, with_rho):
    # one full warp of the TV-L1 scheme; all planes padded; state is aliased
    # input->output; rho is only emitted when with_rho.
    B, Hp, Wp = x1p.shape
    spec = _plane_spec(Hp, Wp)
    n_out = 7 if with_rho else 6
    outs = pl.pallas_call(
        functools.partial(tv_warp_kernel, theta=theta, l_t=l_t, taut=taut,
                          eps=GRAD_IS_ZERO, n_iters=n_iters, H=H, W=W,
                          with_rho=with_rho),
        out_shape=tuple(jax.ShapeDtypeStruct((B, Hp, Wp), jnp.float32)
                        for _ in range(n_out)),
        grid=(B,),
        in_specs=[spec] * 10,
        out_specs=tuple(spec for _ in range(n_out)),
        input_output_aliases={4: 0, 5: 1, 6: 2, 7: 3, 8: 4, 9: 5},
        compiler_params=_cparams(),
    )(x1p, x2wp, dxwp, dywp, u1p, u2p, p11p, p12p, p21p, p22p)
    return tuple(outs)


# ----------------------------------------------------------------------------
# plain-JAX glue: bilinear grid sampling (warp / zoom)
# TODO(synk): grid_sample is a data-dependent bilinear gather with no clean
#             Pallas TPU equivalent; it stays in plain JAX.
# ----------------------------------------------------------------------------
def _bilinear_gather(img, ix, iy, H, W):
    # img: (B, Hs, Ws) or (B, Hs, Ws, C) whose logical region is (H, W);
    # ix, iy: (B, Hg, Wg) pixel coordinates already clamped to the logical box.
    x0 = jnp.floor(ix)
    y0 = jnp.floor(iy)
    wx = ix - x0
    wy = iy - y0
    x0i = x0.astype(jnp.int32)
    y0i = y0.astype(jnp.int32)
    x1i = jnp.minimum(x0i + 1, W - 1)
    y1i = jnp.minimum(y0i + 1, H - 1)
    b = jnp.arange(img.shape[0])[:, None, None]
    v00 = img[b, y0i, x0i]
    v01 = img[b, y0i, x1i]
    v10 = img[b, y1i, x0i]
    v11 = img[b, y1i, x1i]
    if img.ndim == 4:
        wx = wx[..., None]
        wy = wy[..., None]
    return (v00 * (1 - wx) * (1 - wy) + v01 * wx * (1 - wy)
            + v10 * (1 - wx) * wy + v11 * wx * wy)


def warp_multi(imgs_hwc, u1, u2, H, W):
    # Fused warp of several channels: imgs_hwc (B, Hp, Wp, C), flow u1/u2
    # (B, Hp, Wp) (padded; padded values finite).  Output is padded; only the
    # logical (H, W) region is meaningful (gathers clamp to the logical box).
    _, Hp, Wp, _ = imgs_hwc.shape
    xs = 2.0 * jnp.arange(Wp, dtype=jnp.float32) / (W - 1) - 1.0
    ys = 2.0 * jnp.arange(Hp, dtype=jnp.float32) / (H - 1) - 1.0
    gx = xs[None, None, :] + u1 / (W - 1) * 2.0
    gy = ys[None, :, None] + u2 / (H - 1) * 2.0
    ix = jnp.clip((gx + 1.0) * 0.5 * (W - 1), 0.0, float(W - 1))
    iy = jnp.clip((gy + 1.0) * 0.5 * (H - 1), 0.0, float(H - 1))
    return _bilinear_gather(imgs_hwc, ix, iy, H, W)


def zoom_image(xp, H, W, new_h, new_w):
    # bilinear zoom (align_corners=True, border) from the logical (H, W) region
    # of a (possibly padded) plane xp: (B, Hs, Ws) -> (B, new_h, new_w)
    B = xp.shape[0]
    gx = jnp.broadcast_to(
        jnp.linspace(-1.0, 1.0, new_w, dtype=jnp.float32)[None, None, :],
        (B, new_h, new_w))
    gy = jnp.broadcast_to(
        jnp.linspace(-1.0, 1.0, new_h, dtype=jnp.float32)[None, :, None],
        (B, new_h, new_w))
    ix = jnp.clip((gx + 1.0) * 0.5 * (W - 1), 0.0, float(W - 1))
    iy = jnp.clip((gy + 1.0) * 0.5 * (H - 1), 0.0, float(H - 1))
    return _bilinear_gather(xp, ix, iy, H, W)


def zoom_size(height, width, factor):
    return int(float(height) * factor + 0.5), int(float(width) * factor + 0.5)


# ----------------------------------------------------------------------------
# TvNet forward
# ----------------------------------------------------------------------------
class TvNetPallas:
    def __init__(self, min_size, tau=0.25, lbda=0.15, theta=0.3, warps=5,
                 zfactor=0.5, max_scales=5, max_iterations=5):
        self.tau = tau
        self.lbda = lbda
        self.theta = theta
        self.warps = warps
        self.zfactor = float(zfactor)
        self.iters = max_iterations
        self.l_t = lbda * theta
        self.taut = tau / theta
        height, width = min_size
        n_scales = 1 + np.log(np.sqrt(height ** 2 + width ** 2) / 4.0) / np.log(1 / self.zfactor)
        # the torch module requires min(...) to resolve to the int `max_scales`
        self.n_scales = int(min(n_scales, max_scales))

    def _per_scale(self, x1p, x2p, u1p, u2p, H, W):
        # all planes padded (B, Hp, Wp) with logical region (H, W)
        d2xp, d2yp = centered_grad(x2p, H, W)
        p11p = jnp.zeros_like(x1p)
        p12p = jnp.zeros_like(x1p)
        p21p = jnp.zeros_like(x1p)
        p22p = jnp.zeros_like(x1p)
        imgs = jnp.stack([x2p, d2xp, d2yp], axis=-1)   # (B, Hp, Wp, 3)
        rho_p = None
        for w in range(self.warps):
            last = (w == self.warps - 1)
            warped = warp_multi(imgs, u1p, u2p, H, W)  # fused 3-channel gather
            x2wp = warped[..., 0]
            dxwp = warped[..., 1]
            dywp = warped[..., 2]
            outs = tv_warp(x1p, x2wp, dxwp, dywp, u1p, u2p,
                           p11p, p12p, p21p, p22p,
                           H=H, W=W, theta=self.theta, l_t=self.l_t,
                           taut=self.taut, n_iters=self.iters, with_rho=last)
            if last:
                u1p, u2p, p11p, p12p, p21p, p22p, rho_p = outs
            else:
                u1p, u2p, p11p, p12p, p21p, p22p = outs
        return u1p, u2p, rho_p

    def __call__(self, x1, x2):
        B, _, H, W = x1.shape
        smooth_x1 = grey_gauss(x1)   # padded (B, Hp, Wp), logical (H, W)
        smooth_x2 = grey_gauss(x2)

        ss = self.n_scales - 1
        u1p = u2p = rho_p = None
        dh = dw = None
        for _ in range(self.n_scales):
            factor = self.zfactor ** ss
            dh, dw = zoom_size(H, W, factor)
            down_x1 = zoom_image(smooth_x1, H, W, dh, dw)   # logical (B, dh, dw)
            down_x2 = zoom_image(smooth_x2, H, W, dh, dw)
            dhp, dwp = _round_up(dh, SUBLANE), _round_up(dw, LANE)
            x1p = _pad_hw(down_x1, dhp, dwp)
            x2p = _pad_hw(down_x2, dhp, dwp)
            if ss == self.n_scales - 1:
                u1p = jnp.zeros((B, dhp, dwp), jnp.float32)
                u2p = jnp.zeros((B, dhp, dwp), jnp.float32)
            u1p, u2p, rho_p = self._per_scale(x1p, x2p, u1p, u2p, dh, dw)
            if ss == 0:
                break
            uh, uw = zoom_size(H, W, self.zfactor ** (ss - 1))
            u1l = zoom_image(u1p, dh, dw, uh, uw) / self.zfactor
            u2l = zoom_image(u2p, dh, dw, uh, uw) / self.zfactor
            uhp, uwp = _round_up(uh, SUBLANE), _round_up(uw, LANE)
            u1p = _pad_hw(u1l, uhp, uwp)
            u2p = _pad_hw(u2l, uhp, uwp)
            ss -= 1

        # crop back to logical and return NCHW (B, 1, h, w) like the torch module
        u1 = u1p[:, :dh, :dw][:, None]
        u2 = u2p[:, :dh, :dw][:, None]
        rho = rho_p[:, :dh, :dw][:, None]
        return u1, u2, rho


if __name__ == "__main__":
    key = jax.random.PRNGKey(0)
    k1, k2 = jax.random.split(key)
    x1 = jax.random.normal(k1, (2, 3, 16, 16), dtype=jnp.float32)
    x2 = jax.random.normal(k2, (2, 3, 16, 16), dtype=jnp.float32)

    net = TvNetPallas(min_size=(16, 16), warps=2, max_scales=2, max_iterations=2)
    u1, u2, rho = net(x1, x2)
    jax.block_until_ready((u1, u2, rho))
    assert u1.shape == (2, 1, 16, 16) and u2.shape == (2, 1, 16, 16) and rho.shape == (2, 1, 16, 16)
    assert bool(jnp.all(jnp.isfinite(u1))) and bool(jnp.all(jnp.isfinite(u2))) and bool(jnp.all(jnp.isfinite(rho)))
    print("KERNEL_OK")
</pallas_src>

<mosaic_0001>
module attributes {stable_mosaic.version = 11 : i64} {
  func.func @grey_gauss_kernel(%arg0: i32, %arg1: memref<1x3x16x128xf32, #tpu.memory_space<vmem>>, %arg2: memref<1x16x128xf32, #tpu.memory_space<vmem>>) attributes {dimension_semantics = [#tpu.dimension_semantics<parallel>], iteration_bounds = array<i64: 2>, scalar_prefetch = 0 : i64, scratch_operands = 0 : i64, tpu.core_type = #tpu.core_type<tc>, window_params = [{transform_indices = @transform_0, window_bounds = array<i64: 1, 3, 16, 128>}, {transform_indices = @transform_1, window_bounds = array<i64: 1, 16, 128>}]} {
    %c0 = arith.constant 0 : index
    %c0_0 = arith.constant 0 : index
    %c0_1 = arith.constant 0 : index
    %c0_2 = arith.constant 0 : index
    %0 = vector.load %arg1[%c0, %c0_0, %c0_1, %c0_2] : memref<1x3x16x128xf32, #tpu.memory_space<vmem>>, vector<1x1x16x128xf32>
    %1 = vector.shape_cast %0 : vector<1x1x16x128xf32> to vector<16x128xf32>
    %c0_3 = arith.constant 0 : index
    %c1 = arith.constant 1 : index
    %c0_4 = arith.constant 0 : index
    %c0_5 = arith.constant 0 : index
    %2 = vector.load %arg1[%c0_3, %c1, %c0_4, %c0_5] : memref<1x3x16x128xf32, #tpu.memory_space<vmem>>, vector<1x1x16x128xf32>
    %3 = vector.shape_cast %2 : vector<1x1x16x128xf32> to vector<16x128xf32>
    %c0_6 = arith.constant 0 : index
    %c2 = arith.constant 2 : index
    %c0_7 = arith.constant 0 : index
    %c0_8 = arith.constant 0 : index
    %4 = vector.load %arg1[%c0_6, %c2, %c0_7, %c0_8] : memref<1x3x16x128xf32, #tpu.memory_space<vmem>>, vector<1x1x16x128xf32>
    %5 = vector.shape_cast %4 : vector<1x1x16x128xf32> to vector<16x128xf32>
    %cst = arith.constant 1.140000e-01 : f32
    %6 = vector.broadcast %cst : f32 to vector<16x128xf32>
    %7 = arith.mulf %6, %1 : vector<16x128xf32>
    %cst_9 = arith.constant 5.870000e-01 : f32
    %8 = vector.broadcast %cst_9 : f32 to vector<16x128xf32>
    %9 = arith.mulf %8, %3 : vector<16x128xf32>
    %10 = arith.addf %7, %9 : vector<16x128xf32>
    %cst_10 = arith.constant 2.990000e-01 : f32
    %11 = vector.broadcast %cst_10 : f32 to vector<16x128xf32>
    %12 = arith.mulf %11, %5 : vector<16x128xf32>
    %13 = arith.addf %10, %12 : vector<16x128xf32>
    %14 = vector.shape_cast %13 : vector<16x128xf32> to vector<1x16x128xf32>
    %cst_11 = arith.constant dense<0x7F800000> : vector<1xf32>
    %15 = vector.multi_reduction <minimumf>, %14, %cst_11 [1, 2] : vector<1x16x128xf32> to vector<1xf32>
    %16 = vector.shape_cast %15 : vector<1xf32> to vector<1x1x1xf32>
    %17 = vector.extract %16[0, 0, 0] : f32 from vector<1x1x1xf32>
    %18 = vector.shape_cast %13 : vector<16x128xf32> to vector<1x16x128xf32>
    %cst_12 = arith.constant dense<0xFF800000> : vector<1xf32>
    %19 = vector.multi_reduction <maximumf>, %18, %cst_12 [1, 2] : vector<1x16x128xf32> to vector<1xf32>
    %20 = vector.shape_cast %19 : vector<1xf32> to vector<1x1x1xf32>
    %21 = vector.extract %20[0, 0, 0] : f32 from vector<1x1x1xf32>
    %22 = arith.subf %21, %17 : f32
    %cst_13 = arith.constant 0.000000e+00 : f32
    %23 = arith.cmpf one, %22, %cst_13 : f32
    %cst_14 = arith.constant 1.000000e+00 : f32
    %24 = arith.divf %cst_14, %22 : f32
    %cst_15 = arith.constant 0.000000e+00 : f32
    %25 = arith.select %23, %24, %cst_15 : f32
    %26 = vector.broadcast %17 : f32 to vector<16x128xf32>
    %27 = arith.subf %13, %26 : vector<16x128xf32>
    %28 = vector.broadcast %25 : f32 to vector<16x128xf32>
    %29 = arith.mulf %27, %28 : vector<16x128xf32>
    %cst_16 = arith.constant 2.550000e+02 : f32
    %30 = vector.broadcast %cst_16 : f32 to vector<16x128xf32>
    %31 = arith.mulf %29, %30 : vector<16x128xf32>
    %32 = tpu.iota {dimensions = array<i32: 0>} : vector<16x128xi32>
    %33 = tpu.iota {dimensions = array<i32: 1>} : vector<16x128xi32>
    %c0_i32 = arith.constant 0 : i32
    %34 = vector.broadcast %c0_i32 : i32 to vector<16x128xi32>
    %35 = arith.cmpi eq, %32, %34 : vector<16x128xi32>
    %c15_i32 = arith.constant 15 : i32
    %36 = vector.broadcast %c15_i32 : i32 to vector<16x128xi32>
    %37 = arith.cmpi eq, %32, %36 : vector<16x128xi32>
    %c0_i32_17 = arith.constant 0 : i32
    %38 = vector.broadcast %c0_i32_17 : i32 to vector<16x128xi32>
    %39 = arith.cmpi eq, %33, %38 : vector<16x128xi32>
    %c15_i32_18 = arith.constant 15 : i32
    %40 = vector.broadcast %c15_i32_18 : i32 to vector<16x128xi32>
    %41 = arith.cmpi eq, %33, %40 : vector<16x128xi32>
    %c15_i32_19 = arith.constant 15 : i32
    %42 = tpu.dynamic_rotate %31 by %c15_i32_19 dim 0 : vector<16x128xf32>, i32 -> vector<16x128xf32>
    %43 = arith.select %37, %31, %42 : vector<16x128xi1>, vector<16x128xf32>
    %c15_i32_20 = arith.constant 15 : i32
    %44 = tpu.dynamic_rotate %43 by %c15_i32_20 dim 0 : vector<16x128xf32>, i32 -> vector<16x128xf32>
    %45 = arith.select %37, %43, %44 : vector<16x128xi1>, vector<16x128xf32>
    %c1_i32 = arith.constant 1 : i32
    %46 = tpu.dynamic_rotate %31 by %c1_i32 dim 0 : vector<16x128xf32>, i32 -> vector<16x128xf32>
    %47 = arith.select %35, %31, %46 : vector<16x128xi1>, vector<16x128xf32>
    %c1_i32_21 = arith.constant 1 : i32
    %48 = tpu.dynamic_rotate %47 by %c1_i32_21 dim 0 : vector<16x128xf32>, i32 -> vector<16x128xf32>
    %49 = arith.select %35, %47, %48 : vector<16x128xi1>, vector<16x128xf32>
    %cst_22 = arith.constant 0.000000e+00 : f32
    %50 = vector.broadcast %cst_22 : f32 to vector<16x128xf32>
    %c127_i32 = arith.constant 127 : i32
    %51 = tpu.dynamic_rotate %49 by %c127_i32 dim 1 : vector<16x128xf32>, i32 -> vector<16x128xf32>
    %52 = arith.select %41, %49, %51 : vector<16x128xi1>, vector<16x128xf32>
    %c127_i32_23 = arith.constant 127 : i32
    %53 = tpu.dynamic_rotate %52 by %c127_i32_23 dim 1 : vector<16x128xf32>, i32 -> vector<16x128xf32>
    %54 = arith.select %41, %52, %53 : vector<16x128xi1>, vector<16x128xf32>
    %c1_i32_24 = arith.constant 1 : i32
    %55 = tpu.dynamic_rotate %49 by %c1_i32_24 dim 1 : vector<16x128xf32>, i32 -> vector<16x128xf32>
    %56 = arith.select %39, %49, %55 : vector<16x128xi1>, vector<16x128xf32>
    %c1_i32_25 = arith.constant 1 : i32
    %57 = tpu.dynamic_rotate %56 by %c1_i32_25 dim 1 : vector<16x128xf32>, i32 -> vector<16x128xf32>
    %58 = arith.select %39, %56, %57 : vector<16x128xi1>, vector<16x128xf32>
    %cst_26 = arith.constant 8.740000e-04 : f32
    %59 = vector.broadcast %cst_26 : f32 to vector<16x128xf32>
    %60 = arith.mulf %59, %58 : vector<16x128xf32>
    %61 = arith.addf %50, %60 : vector<16x128xf32>
    %cst_27 = arith.constant 6.976000e-03 : f32
    %62 = vector.broadcast %cst_27 : f32 to vector<16x128xf32>
    %63 = arith.mulf %62, %56 : vector<16x128xf32>
    %64 = arith.addf %61, %63 : vector<16x128xf32>
    %cst_28 = arith.constant 1.386000e-02 : f32
    %65 = vector.broadcast %cst_28 : f32 to vector<16x128xf32>
    %66 = arith.mulf %65, %49 : vector<16x128xf32>
    %67 = arith.addf %64, %66 : vector<16x128xf32>
    %cst_29 = arith.constant 6.976000e-03 : f32
    %68 = vector.broadcast %cst_29 : f32 to vector<16x128xf32>
    %69 = arith.mulf %68, %52 : vector<16x128xf32>
    %70 = arith.addf %67, %69 : vector<16x128xf32>
    %cst_30 = arith.constant 8.740000e-04 : f32
    %71 = vector.broadcast %cst_30 : f32 to vector<16x128xf32>
    %72 = arith.mulf %71, %54 : vector<16x128xf32>
    %73 = arith.addf %70, %72 : vector<16x128xf32>
    %c127_i32_31 = arith.constant 127 : i32
    %74 = tpu.dynamic_rotate %47 by %c127_i32_31 dim 1 : vector<16x128xf32>, i32 -> vector<16x128xf32>
    %75 = arith.select %41, %47, %74 : vector<16x128xi1>, vector<16x128xf32>
    %c127_i32_32 = arith.constant 127 : i32
    %76 = tpu.dynamic_rotate %75 by %c127_i32_32 dim 1 : vector<16x128xf32>, i32 -> vector<16x128xf32>
    %77 = arith.select %41, %75, %76 : vector<16x128xi1>, vector<16x128xf32>
    %c1_i32_33 = arith.constant 1 : i32
    %78 = tpu.dynamic_rotate %47 by %c1_i32_33 dim 1 : vector<16x128xf32>, i32 -> vector<16x128xf32>
    %79 = arith.select %39, %47, %78 : vector<16x128xi1>, vector<16x128xf32>
    %c1_i32_34 = arith.constant 1 : i32
    %80 = tpu.dynamic_rotate %79 by %c1_i32_34 dim 1 : vector<16x128xf32>, i32 -> vector<16x128xf32>
    %81 = arith.select %39, %79, %80 : vector<16x128xi1>, vector<16x128xf32>
    %cst_35 = arith.constant 6.976000e-03 : f32
    %82 = vector.broadcast %cst_35 : f32 to vector<16x128xf32>
    %83 = arith.mulf %82, %81 : vector<16x128xf32>
    %84 = arith.addf %73, %83 : vector<16x128xf32>
    %cst_36 = arith.constant 5.570000e-02 : f32
    %85 = vector.broadcast %cst_36 : f32 to vector<16x128xf32>
    %86 = arith.mulf %85, %79 : vector<16x128xf32>
    %87 = arith.addf %84, %86 : vector<16x128xf32>
    %cst_37 = arith.constant 1.106560e-01 : f32
    %88 = vector.broadcast %cst_37 : f32 to vector<16x128xf32>
    %89 = arith.mulf %88, %47 : vector<16x128xf32>
    %90 = arith.addf %87, %89 : vector<16x128xf32>
    %cst_38 = arith.constant 5.570000e-02 : f32
    %91 = vector.broadcast %cst_38 : f32 to vector<16x128xf32>
    %92 = arith.mulf %91, %75 : vector<16x128xf32>
    %93 = arith.addf %90, %92 : vector<16x128xf32>
    %cst_39 = arith.constant 6.976000e-03 : f32
    %94 = vector.broadcast %cst_39 : f32 to vector<16x128xf32>
    %95 = arith.mulf %94, %77 : vector<16x128xf32>
    %96 = arith.addf %93, %95 : vector<16x128xf32>
    %c127_i32_40 = arith.constant 127 : i32
    %97 = tpu.dynamic_rotate %31 by %c127_i32_40 dim 1 : vector<16x128xf32>, i32 -> vector<16x128xf32>
    %98 = arith.select %41, %31, %97 : vector<16x128xi1>, vector<16x128xf32>
    %c127_i32_41 = arith.constant 127 : i32
    %99 = tpu.dynamic_rotate %98 by %c127_i32_41 dim 1 : vector<16x128xf32>, i32 -> vector<16x128xf32>
    %100 = arith.select %41, %98, %99 : vector<16x128xi1>, vector<16x128xf32>
    %c1_i32_42 = arith.constant 1 : i32
    %101 = tpu.dynamic_rotate %31 by %c1_i32_42 dim 1 : vector<16x128xf32>, i32 -> vector<16x128xf32>
    %102 = arith.select %39, %31, %101 : vector<16x128xi1>, vector<16x128xf32>
    %c1_i32_43 = arith.constant 1 : i32
    %103 = tpu.dynamic_rotate %102 by %c1_i32_43 dim 1 : vector<16x128xf32>, i32 -> vector<16x128xf32>
    %104 = arith.select %39, %102, %103 : vector<16x128xi1>, vector<16x128xf32>
    %cst_44 = arith.constant 1.386000e-02 : f32
    %105 = vector.broadcast %cst_44 : f32 to vector<16x128xf32>
    %106 = arith.mulf %105, %104 : vector<16x128xf32>
    %107 = arith.addf %96, %106 : vector<16x128xf32>
    %cst_45 = arith.constant 1.106560e-01 : f32
    %108 = vector.broadcast %cst_45 : f32 to vector<16x128xf32>
    %109 = arith.mulf %108, %102 : vector<16x128xf32>
    %110 = arith.addf %107, %109 : vector<16x128xf32>
    %cst_46 = arith.constant 2.198330e-01 : f32
    %111 = vector.broadcast %cst_46 : f32 to vector<16x128xf32>
    %112 = arith.mulf %111, %31 : vector<16x128xf32>
    %113 = arith.addf %110, %112 : vector<16x128xf32>
    %cst_47 = arith.constant 1.106560e-01 : f32
    %114 = vector.broadcast %cst_47 : f32 to vector<16x128xf32>
    %115 = arith.mulf %114, %98 : vector<16x128xf32>
    %116 = arith.addf %113, %115 : vector<16x128xf32>
    %cst_48 = arith.constant 1.386000e-02 : f32
    %117 = vector.broadcast %cst_48 : f32 to vector<16x128xf32>
    %118 = arith.mulf %117, %100 : vector<16x128xf32>
    %119 = arith.addf %116, %118 : vector<16x128xf32>
    %c127_i32_49 = arith.constant 127 : i32
    %120 = tpu.dynamic_rotate %43 by %c127_i32_49 dim 1 : vector<16x128xf32>, i32 -> vector<16x128xf32>
    %121 = arith.select %41, %43, %120 : vector<16x128xi1>, vector<16x128xf32>
    %c127_i32_50 = arith.constant 127 : i32
    %122 = tpu.dynamic_rotate %121 by %c127_i32_50 dim 1 : vector<16x128xf32>, i32 -> vector<16x128xf32>
    %123 = arith.select %41, %121, %122 : vector<16x128xi1>, vector<16x128xf32>
    %c1_i32_51 = arith.constant 1 : i32
    %124 = tpu.dynamic_rotate %43 by %c1_i32_51 dim 1 : vector<16x128xf32>, i32 -> vector<16x128xf32>
    %125 = arith.select %39, %43, %124 : vector<16x128xi1>, vector<16x128xf32>
    %c1_i32_52 = arith.constant 1 : i32
    %126 = tpu.dynamic_rotate %125 by %c1_i32_52 dim 1 : vector<16x128xf32>, i32 -> vector<16x128xf32>
    %127 = arith.select %39, %125, %126 : vector<16x128xi1>, vector<16x128xf32>
    %cst_53 = arith.constant 6.976000e-03 : f32
    %128 = vector.broadcast %cst_53 : f32 to vector<16x128xf32>
    %129 = arith.mulf %128, %127 : vector<16x128xf32>
    %130 = arith.addf %119, %129 : vector<16x128xf32>
    %cst_54 = arith.constant 5.570000e-02 : f32
    %131 = vector.broadcast %cst_54 : f32 to vector<16x128xf32>
    %132 = arith.mulf %131, %125 : vector<16x128xf32>
    %133 = arith.addf %130, %132 : vector<16x128xf32>
    %cst_55 = arith.constant 1.106560e-01 : f32
    %134 = vector.broadcast %cst_55 : f32 to vector<16x128xf32>
    %135 = arith.mulf %134, %43 : vector<16x128xf32>
    %136 = arith.addf %133, %135 : vector<16x128xf32>
    %cst_56 = arith.constant 5.570000e-02 : f32
    %137 = vector.broadcast %cst_56 : f32 to vector<16x128xf32>
    %138 = arith.mulf %137, %121 : vector<16x128xf32>
    %139 = arith.addf %136, %138 : vector<16x128xf32>
    %cst_57 = arith.constant 6.976000e-03 : f32
    %140 = vector.broadcast %cst_57 : f32 to vector<16x128xf32>
    %141 = arith.mulf %140, %123 : vector<16x128xf32>
    %142 = arith.addf %139, %141 : vector<16x128xf32>
    %c127_i32_58 = arith.constant 127 : i32
    %143 = tpu.dynamic_rotate %45 by %c127_i32_58 dim 1 : vector<16x128xf32>, i32 -> vector<16x128xf32>
    %144 = arith.select %41, %45, %143 : vector<16x128xi1>, vector<16x128xf32>
    %c127_i32_59 = arith.constant 127 : i32
    %145 = tpu.dynamic_rotate %144 by %c127_i32_59 dim 1 : vector<16x128xf32>, i32 -> vector<16x128xf32>
    %146 = arith.select %41, %144, %145 : vector<16x128xi1>, vector<16x128xf32>
    %c1_i32_60 = arith.constant 1 : i32
    %147 = tpu.dynamic_rotate %45 by %c1_i32_60 dim 1 : vector<16x128xf32>, i32 -> vector<16x128xf32>
    %148 = arith.select %39, %45, %147 : vector<16x128xi1>, vector<16x128xf32>
    %c1_i32_61 = arith.constant 1 : i32
    %149 = tpu.dynamic_rotate %148 by %c1_i32_61 dim 1 : vector<16x128xf32>, i32 -> vector<16x128xf32>
    %150 = arith.select %39, %148, %149 : vector<16x128xi1>, vector<16x128xf32>
    %cst_62 = arith.constant 8.740000e-04 : f32
    %151 = vector.broadcast %cst_62 : f32 to vector<16x128xf32>
    %152 = arith.mulf %151, %150 : vector<16x128xf32>
    %153 = arith.addf %142, %152 : vector<16x128xf32>
    %cst_63 = arith.constant 6.976000e-03 : f32
    %154 = vector.broadcast %cst_63 : f32 to vector<16x128xf32>
    %155 = arith.mulf %154, %148 : vector<16x128xf32>
    %156 = arith.addf %153, %155 : vector<16x128xf32>
    %cst_64 = arith.constant 1.386000e-02 : f32
    %157 = vector.broadcast %cst_64 : f32 to vector<16x128xf32>
    %158 = arith.mulf %157, %45 : vector<16x128xf32>
    %159 = arith.addf %156, %158 : vector<16x128xf32>
    %cst_65 = arith.constant 6.976000e-03 : f32
    %160 = vector.broadcast %cst_65 : f32 to vector<16x128xf32>
    %161 = arith.mulf %160, %144 : vector<16x128xf32>
    %162 = arith.addf %159, %161 : vector<16x128xf32>
    %cst_66 = arith.constant 8.740000e-04 : f32
    %163 = vector.broadcast %cst_66 : f32 to vector<16x128xf32>
    %164 = arith.mulf %163, %146 : vector<16x128xf32>
    %165 = arith.addf %162, %164 : vector<16x128xf32>
    %c0_67 = arith.constant 0 : index
    %c0_68 = arith.constant 0 : index
    %c0_69 = arith.constant 0 : index
    %166 = vector.load %arg2[%c0_67, %c0_68, %c0_69] : memref<1x16x128xf32, #tpu.memory_space<vmem>>, vector<1x16x128xf32>
    %167 = vector.shape_cast %166 : vector<1x16x128xf32> to vector<16x128xf32>
    %168 = vector.shape_cast %165 : vector<16x128xf32> to vector<1x16x128xf32>
    tpu.vector_store %arg2[%c0_67, %c0_68, %c0_69], %168 {strides = array<i32>} : memref<1x16x128xf32, #tpu.memory_space<vmem>>, vector<1x16x128xf32>,
    return
  }
  func.func @transform_0(%arg0: i32) -> (i32, i32, i32, i32) {
    %c0_i32 = arith.constant 0 : i32
    %c0_i32_0 = arith.constant 0 : i32
    %c0_i32_1 = arith.constant 0 : i32
    %c0_i32_2 = arith.constant 0 : i32
    return %arg0, %c0_i32, %c0_i32_0, %c0_i32_1 : i32, i32, i32, i32
  }
  func.func @transform_1(%arg0: i32) -> (i32, i32, i32) {
    %c0_i32 = arith.constant 0 : i32
    %c0_i32_0 = arith.constant 0 : i32
    %c0_i32_1 = arith.constant 0 : i32
    return %arg0, %c0_i32, %c0_i32_0 : i32, i32, i32
  }
}

</mosaic_0001>

<llo_original>
// kernel: tpu_custom_call.1
$region0: #{tpu_custom_call.1}
  #allocation0 [shape = 'u32[]', space=smem, size = 0x4, offset = 0x4, fixed_abs, tag = 'smem constant byte address 0x4 - core index']
  #allocation1 [shape = 'u32[144,128]{1,0:T(1,128)}', space=vmem, size = 0x12000, scoped, tag = 'internal scratch']
  %s0 = inlined_call_operand.hbm [shape: f32[2,3,16,128], index: 0, kind: input, shape index: {}]
  %s1 = inlined_call_operand.hbm [shape: f32[2,16,128], index: 1, kind: output, shape index: {}]
  %s2 = sld [smem:[#allocation0]]
  $region41: #{tpu_custom_call.1} parent=0
    _
  %s4 = ssub.s32 1, %s2
  %s5 = scalar_select 0, %s4, %s2
  $region1: #{tpu_custom_call.1} parent=0
    #allocation2 [shape = 'u8[49152]{0}', space=vmem, size = 0xc000, scoped, tag = 'input window, operand 0']
    #allocation3 [shape = 's32[2]{0}', space=sflag, size = 0x8, scoped, tag = 'scoped memory for tpu_custom_call.1']
    #allocation4 [shape = 's32[2]{0}', space=sflag, size = 0x8, scoped, tag = 'scoped memory for tpu_custom_call.1']
    #allocation5 [shape = 'u8[16384]{0}', space=vmem, size = 0x4000, scoped, tag = 'output window, operand 0']
    %6 = vsyncpa [#allocation3], 0
    %s7 = scalar_lea.sflag [#allocation3], 1
    %8 = vsyncpa %s7, 0
    %9 = vsyncpa [#allocation4], 0
    %s10 = scalar_lea.sflag [#allocation4], 1
    %11 = vsyncpa %s10, 0
    loop: start=0, step=1, limit=4
    $region2: #{tpu_custom_call.1} parent=1 // loop_pre_header
      _
    $region3: #{tpu_custom_call.1} parent=1 // loop_header
      %s13 = sphi 0, %s17
      %p14 = scmp.ge.s32.totalorder %s13, 4
      %s23 = sphi 0, %s25
      %s26 = sphi 0, %s23
      %s27 = sphi 0, %s26
      %s43 = sphi 0, %s27
      %s49 = sphi 0, %s51
      %s52 = sphi 0, %s49
      %s53 = sphi 0, %s52
      %s69 = sphi 0, %s53
    $region4: #{tpu_custom_call.1} parent=1 // loop_header_branch
      %16 = sbr.rel (%p14) target = $region8
    $region5: #{tpu_custom_call.1} parent=1 // loop_body
      %s18 = ssub.s32 %s13, 1
      %s19 = ssub.s32 %s13, 2
      %s20 = sadd.s32 %s13, 1
      %s21 = ssub.s32 %s13, %s20
      %p22 = scmp.eq.s32.totalorder %s21, 0
      %s24 = sadd.s32 %s23, 1
      %s25 = scalar_select %p22, %s23, %s24
      %p28 = pneg %p22
      %p29 = scmp.eq.s32.totalorder %s13, 1
      %p30 = por %p28, %p29
      %p31 = scmp.ne.s32.totalorder %s23, %s26
      %p32 = scmp.eq.s32.totalorder %s13, 0
      %p33 = por %p31, %p32
      %p34 = scmp.ne.s32.totalorder %s23, %s26
      %p35 = scmp.eq.s32.totalorder %s18, 1
      %p36 = por %p34, %p35
      %p37 = scmp.ne.s32.totalorder %s26, %s27
      %p38 = scmp.eq.s32.totalorder %s18, 0
      %p39 = por %p37, %p38
      %p40 = scmp.ne.s32.totalorder %s26, %s27
      %p41 = scmp.eq.s32.totalorder %s19, 1
      %p42 = por %p40, %p41
      %p44 = scmp.ne.s32.totalorder %s27, %s43
      %p45 = scmp.eq.s32.totalorder %s19, 0
      %p46 = por %p44, %p45
      %s47 = ssub.s32 %s13, %s20
      %p48 = scmp.eq.s32.totalorder %s47, 0
      %s50 = sadd.s32 %s49, 1
      %s51 = scalar_select %p48, %s49, %s50
      %p54 = pneg %p48
      %p55 = scmp.eq.s32.totalorder %s13, 1
      %p56 = por %p54, %p55
      %p57 = scmp.ne.s32.totalorder %s49, %s52
      %p58 = scmp.eq.s32.totalorder %s13, 0
      %p59 = por %p57, %p58
      %p60 = scmp.ne.s32.totalorder %s49, %s52
      %p61 = scmp.eq.s32.totalorder %s18, 1
      %p62 = por %p60, %p61
      %p63 = scmp.ne.s32.totalorder %s52, %s53
      %p64 = scmp.eq.s32.totalorder %s18, 0
      %p65 = por %p63, %p64
      %p66 = scmp.ne.s32.totalorder %s52, %s53
      %p67 = scmp.eq.s32.totalorder %s19, 1
      %p68 = por %p66, %p67
      %p70 = scmp.ne.s32.totalorder %s53, %s69
      %p71 = scmp.eq.s32.totalorder %s19, 0
      %p72 = por %p70, %p71
      %p73 = scmp.le.s32.totalorder 1, %s13
      %p74 = scmp.lt.s32.totalorder %s13, 3
      %p75 = pnand %p73, %p74
      %p76 = pneg %p75
      // Predicated region
      $region9: #{tpu_custom_call.1} parent=5 // pred_check
        _
      $region10: #{tpu_custom_call.1} parent=5 // pred_check_branch
        %78 = sbr.rel (%p75) target = $region12
      $region11: #{tpu_custom_call.1} parent=5 // pred_region
        %s79 = ssub.s32 %s13, 1
      $region12: #{tpu_custom_call.1} parent=5 // pred_fallthru
        _
      %p80 = scmp.lt.s32.totalorder %s13, 2
      // Predicated region
      $region13: #{tpu_custom_call.1} parent=5 // pred_check
        %p81 = pneg %p80
      $region14: #{tpu_custom_call.1} parent=5 // pred_check_branch
        %83 = sbr.rel (%p81) target = $region16
      $region15: #{tpu_custom_call.1} parent=5 // pred_region
        // Predicated region
        $region17: #{tpu_custom_call.1} parent=15 // pred_check
          %p84 = pneg %p33
        $region18: #{tpu_custom_call.1} parent=15 // pred_check_branch
          %86 = sbr.rel (%p84) target = $region20
        $region19: #{tpu_custom_call.1} parent=15 // pred_region
          %s87 = sand.u32 %s23, 1
          %s88 = scalar_lea.sflag [#allocation3], %s87
          %s89 = sand.u32 %s23, 1
          %s90 = smul.addr %s89, 48
          %s91 = scalar_lea.vmem [#allocation2], %s90
          %s93 = ssub.s32 768, 768
          %94 = vsyncadd %s88, %s93
          %s95 = smul.addr %s13, 6
          %s96 = smul.addr %s95, 128
          %s97 = scalar_lea.hbm %s0, %s96
          %s98 = sshll.u32 %s91, 4
          %s99 = int_to_ptr.vmem [resolvable:$true] %s98
          %104 = dma.hbm_to_vmem [thread:$0]  %s97, 768, %s99, %s88, 128, 128, 8
        $region20: #{tpu_custom_call.1} parent=15 // pred_fallthru
          _
      $region16: #{tpu_custom_call.1} parent=5 // pred_fallthru
        _
      %p105 = scmp.le.s32.totalorder 1, %s13
      %p106 = scmp.lt.s32.totalorder %s13, 3
      %p107 = pnand %p105, %p106
      %p108 = pneg %p107
      // Predicated region
      $region21: #{tpu_custom_call.1} parent=5 // pred_check
        _
      $region22: #{tpu_custom_call.1} parent=5 // pred_check_branch
        %110 = sbr.rel (%p107) target = $region24
      $region23: #{tpu_custom_call.1} parent=5 // pred_region
        %s111 = ssub.s32 %s13, 1
        %s112 = sand.u32 %s26, 1
        %s113 = scalar_lea.sflag [#allocation3], %s112
        %s114 = sand.u32 %s26, 1
        %s115 = smul.addr %s114, 48
        %s116 = scalar_lea.vmem [#allocation2], %s115
        // Predicated region
        $region25: #{tpu_custom_call.1} parent=23 // pred_check
          %p117 = pneg %p39
        $region26: #{tpu_custom_call.1} parent=23 // pred_check_branch
          %119 = sbr.rel (%p117) target = $region28
        $region27: #{tpu_custom_call.1} parent=23 // pred_region
          %120 = dma.done %s113, 768
        $region28: #{tpu_custom_call.1} parent=23 // pred_fallthru
          _
        %s121 = sand.u32 %s26, 1
        %s122 = scalar_lea.sflag [#allocation3], %s121
        %s123 = sand.u32 %s26, 1
        %s124 = smul.addr %s123, 48
        %s125 = scalar_lea.vmem [#allocation2], %s124
        %p126 = pneg %p39
        %p127 = pneg %p36
        %p128 = pneg %p65
        %p129 = pneg %p62
        %s130 = sand.u32 %s52, 1
        %s131 = scalar_lea.sflag [#allocation4], %s130
        %s132 = sand.u32 %s52, 1
        %s133 = smul.addr %s132, 16
        %s134 = scalar_lea.vmem [#allocation5], %s133
        %v135 = vld [vmem:[%s116] sm:$0xff]
        %v136 = vld [vmem:[%s116 + $0x8] sm:$0xff]
        %s137 = scalar_lea.vmem %s116, 16 [#allocation2]
        %v138 = vld [vmem:[%s137] sm:$0xff]
        %v139 = vld [vmem:[%s137 + $0x8] sm:$0xff]
        %s140 = scalar_lea.vmem %s116, 32 [#allocation2]
        %v141 = vld [vmem:[%s140] sm:$0xff]
        %v142 = vld [vmem:[%s140 + $0x8] sm:$0xff]
        %v143 = vmul.f32 %v135, 0.114
        %v144 = vmul.f32 %v136, 0.114
        %v145 = vmul.f32 %v138, 0.587
        %v146 = vmul.f32 %v139, 0.587
        %v147 = vadd.f32 %v143, %v145
        %v148 = vadd.f32 %v144, %v146
        %v149 = vmul.f32 %v141, 0.299
        %v150 = vmul.f32 %v142, 0.299
        %v151 = vadd.f32 %v147, %v149
        %v152 = vadd.f32 %v148, %v150
        %v153 = vmin.f32 %v151, %v152
        %154 = vmin.xlane.f32.xlu0 %v153
        %v155 = vpop.xlane.xlu0 %154
        %v156 = vrot.slane %v155, 4
        %v157 = vmin.f32 %v155, %v156
        %v158 = vrot.slane %v157, 2
        %v159 = vmin.f32 %v157, %v158
        %v160 = vrot.slane %v159, 1
        %v161 = vmin.f32 %v159, %v160
        %s162 = vtos %v161
        %v163 = vmax.f32 %v151, %v152
        %164 = vmax.xlane.f32.xlu0 %v163
        %v165 = vpop.xlane.xlu0 %164
        %v166 = vrot.slane %v165, 4
        %v167 = vmax.f32 %v165, %v166
        %v168 = vrot.slane %v167, 2
        %v169 = vmax.f32 %v167, %v168
        %v170 = vrot.slane %v169, 1
        %v171 = vmax.f32 %v169, %v170
        %s172 = vtos %v171
        %s173 = ssub.f32 %s172, %s162
        %p174 = scmp.ne.f32.partialorder %s173, 0.0
        %v175 = vstv %s173
        %v176 = vrcp.pop %v175
        %s177 = vtos %v176
        %s178 = scalar_select %p174, %s177, 0.0
        %v179 = vstv %s162
        %v180 = vsub.f32 %v151, %v179
        %v181 = vsub.f32 %v152, %v179
        %v182 = vstv %s178
        %v183 = vmul.f32 %v180, %v182
        %v184 = vmul.f32 %v181, %v182
        %v185 = vmul.f32 %v183, 255.0
        %v186 = vmul.f32 %v184, 255.0
        %v187 = vlaneseq
        %v188 = vshrl.u32 %v187, 7
        %v189 = vadd.s32 %v188, 8
        %v190 = vlaneseq
        %v191 = vand.u32 %v190, 127
        %vm192 = vcmp.eq.s32.totalorder %v188, 0
        %vm193 = vcmp.eq.s32.totalorder %v189, 0
        %vm194 = vcmp.eq.s32.totalorder %v188, 15
        %vm195 = vcmp.eq.s32.totalorder %v189, 15
        %vm196 = vcmp.eq.s32.totalorder %v191, 0
        %vm197 = vcmp.eq.s32.totalorder %v191, 15
        %v198 = vrot.slane %v185, 1
        %v199 = vrot.slane %v186, 1
        %vm200 = vcmp.lt.s32.totalorder %v188, 7
        %v201 = vsel %vm200, %v198, %v199
        %v202 = vsel %vm200, %v199, %v198
        %v203 = vsel %vm194, %v185, %v201
        %v204 = vsel %vm195, %v186, %v202
        %v205 = vrot.slane %v203, 1
        %v206 = vrot.slane %v204, 1
        %v207 = vsel %vm200, %v205, %v206
        %v208 = vsel %vm200, %v206, %v205
        %v209 = vsel %vm194, %v185, %v207
        %v210 = vsel %vm195, %v186, %v208
        %v211 = vrot.slane %v185, 7
        %v212 = vrot.slane %v186, 7
        %vm213 = vcmp.lt.s32.totalorder %v188, 1
        %v214 = vsel %vm213, %v211, %v212
        %v215 = vsel %vm213, %v212, %v211
        %v216 = vsel %vm192, %v185, %v215
        %v217 = vsel %vm193, %v186, %v214
        %v218 = vrot.slane %v216, 7
        %v219 = vrot.slane %v217, 7
        %v220 = vsel %vm213, %v218, %v219
        %v221 = vsel %vm213, %v219, %v218
        %v222 = vsel %vm192, %v185, %v221
        %v223 = vsel %vm193, %v186, %v220
        %224 = vrot.lane.b32.xlu0 %v222, 127
        %v225 = vpop.permute.xlu0 %224
        %226 = vrot.lane.b32.xlu0 %v223, 127
        %v227 = vpop.permute.xlu0 %226
        %v228 = vsel %vm197, %v222, %v225
        %v229 = vsel %vm197, %v223, %v227
        %230 = vrot.lane.b32.xlu0 %v228, 127
        %v231 = vpop.permute.xlu0 %230
        %232 = vrot.lane.b32.xlu0 %v229, 127
        %v233 = vpop.permute.xlu0 %232
        %v234 = vsel %vm197, %v222, %v231
        %v235 = vsel %vm197, %v223, %v233
        %236 = vrot.lane.b32.xlu0 %v222, 1
        %v237 = vpop.permute.xlu0 %236
        %238 = vrot.lane.b32.xlu0 %v223, 1
        %v239 = vpop.permute.xlu0 %238
        %v240 = vsel %vm196, %v222, %v237
        %v241 = vsel %vm196, %v223, %v239
        %242 = vrot.lane.b32.xlu0 %v240, 1
        %v243 = vpop.permute.xlu0 %242
        %244 = vrot.lane.b32.xlu0 %v241, 1
        %v245 = vpop.permute.xlu0 %244
        %v246 = vsel %vm196, %v222, %v243
        %v247 = vsel %vm196, %v223, %v245
        %v248 = vmul.f32 %v246, 0.000874
        %v249 = vmul.f32 %v247, 0.000874
        %v250 = vadd.f32 %v248, 0.0
        %v251 = vadd.f32 %v249, 0.0
        %v252 = vmul.f32 %v240, 0.006976
        %v253 = vmul.f32 %v241, 0.006976
        %v254 = vadd.f32 %v250, %v252
        %v255 = vadd.f32 %v251, %v253
        %v256 = vmul.f32 %v222, 0.01386
        %v257 = vmul.f32 %v223, 0.01386
        %v258 = vadd.f32 %v254, %v256
        %v259 = vadd.f32 %v255, %v257
        %v260 = vmul.f32 %v228, 0.006976
        %v261 = vmul.f32 %v229, 0.006976
        %v262 = vadd.f32 %v258, %v260
        %v263 = vadd.f32 %v259, %v261
        %v264 = vmul.f32 %v234, 0.000874
        %v265 = vmul.f32 %v235, 0.000874
        %v266 = vadd.f32 %v262, %v264
        %v267 = vadd.f32 %v263, %v265
        %268 = vrot.lane.b32.xlu0 %v216, 127
        %v269 = vpop.permute.xlu0 %268
        %270 = vrot.lane.b32.xlu0 %v217, 127
        %v271 = vpop.permute.xlu0 %270
        %v272 = vsel %vm197, %v216, %v269
        %v273 = vsel %vm197, %v217, %v271
        %274 = vrot.lane.b32.xlu0 %v272, 127
        %v275 = vpop.permute.xlu0 %274
        %276 = vrot.lane.b32.xlu0 %v273, 127
        %v277 = vpop.permute.xlu0 %276
        %v278 = vsel %vm197, %v216, %v275
        %v279 = vsel %vm197, %v217, %v277
        %280 = vrot.lane.b32.xlu0 %v216, 1
        %v281 = vpop.permute.xlu0 %280
        %282 = vrot.lane.b32.xlu0 %v217, 1
        %v283 = vpop.permute.xlu0 %282
        %v284 = vsel %vm196, %v216, %v281
        %v285 = vsel %vm196, %v217, %v283
        %286 = vrot.lane.b32.xlu0 %v284, 1
        %v287 = vpop.permute.xlu0 %286
        %288 = vrot.lane.b32.xlu0 %v285, 1
        %v289 = vpop.permute.xlu0 %288
        %v290 = vsel %vm196, %v216, %v287
        %v291 = vsel %vm196, %v217, %v289
        %v292 = vmul.f32 %v290, 0.006976
        %v293 = vmul.f32 %v291, 0.006976
        %v294 = vadd.f32 %v266, %v292
        %v295 = vadd.f32 %v267, %v293
        %v296 = vmul.f32 %v284, 0.0557
        %v297 = vmul.f32 %v285, 0.0557
        %v298 = vadd.f32 %v294, %v296
        %v299 = vadd.f32 %v295, %v297
        %v300 = vmul.f32 %v216, 0.110656
        %v301 = vmul.f32 %v217, 0.110656
        %v302 = vadd.f32 %v298, %v300
        %v303 = vadd.f32 %v299, %v301
        %v304 = vmul.f32 %v272, 0.0557
        %v305 = vmul.f32 %v273, 0.0557
        %v306 = vadd.f32 %v302, %v304
        %v307 = vadd.f32 %v303, %v305
        %v308 = vmul.f32 %v278, 0.006976
        %v309 = vmul.f32 %v279, 0.006976
        %v310 = vadd.f32 %v306, %v308
        %v311 = vadd.f32 %v307, %v309
        %312 = vrot.lane.b32.xlu0 %v185, 127
        %v313 = vpop.permute.xlu0 %312
        %314 = vrot.lane.b32.xlu0 %v186, 127
        %v315 = vpop.permute.xlu0 %314
        %v316 = vsel %vm197, %v185, %v313
        %v317 = vsel %vm197, %v186, %v315
        %318 = vrot.lane.b32.xlu0 %v316, 127
        %v319 = vpop.permute.xlu0 %318
        %320 = vrot.lane.b32.xlu0 %v317, 127
        %v321 = vpop.permute.xlu0 %320
        %v322 = vsel %vm197, %v185, %v319
        %v323 = vsel %vm197, %v186, %v321
        %324 = vrot.lane.b32.xlu0 %v185, 1
        %v325 = vpop.permute.xlu0 %324
        %326 = vrot.lane.b32.xlu0 %v186, 1
        %v327 = vpop.permute.xlu0 %326
        %v328 = vsel %vm196, %v185, %v325
        %v329 = vsel %vm196, %v186, %v327
        %330 = vrot.lane.b32.xlu0 %v328, 1
        %v331 = vpop.permute.xlu0 %330
        %332 = vrot.lane.b32.xlu0 %v329, 1
        %v333 = vpop.permute.xlu0 %332
        %v334 = vsel %vm196, %v185, %v331
        %v335 = vsel %vm196, %v186, %v333
        %v336 = vmul.f32 %v334, 0.01386
        %v337 = vmul.f32 %v335, 0.01386
        %v338 = vadd.f32 %v310, %v336
        %v339 = vadd.f32 %v311, %v337
        %v340 = vmul.f32 %v328, 0.110656
        %v341 = vmul.f32 %v329, 0.110656
        %v342 = vadd.f32 %v338, %v340
        %v343 = vadd.f32 %v339, %v341
        %v344 = vmul.f32 %v185, 0.219833
        %v345 = vmul.f32 %v186, 0.219833
        %v346 = vadd.f32 %v342, %v344
        %v347 = vadd.f32 %v343, %v345
        %v348 = vmul.f32 %v316, 0.110656
        %v349 = vmul.f32 %v317, 0.110656
        %v350 = vadd.f32 %v346, %v348
        %v351 = vadd.f32 %v347, %v349
        %v352 = vmul.f32 %v322, 0.01386
        %v353 = vmul.f32 %v323, 0.01386
        %v354 = vadd.f32 %v350, %v352
        %v355 = vadd.f32 %v351, %v353
        %356 = vrot.lane.b32.xlu0 %v203, 127
        %v357 = vpop.permute.xlu0 %356
        %358 = vrot.lane.b32.xlu0 %v204, 127
        %v359 = vpop.permute.xlu0 %358
        %v360 = vsel %vm197, %v203, %v357
        %v361 = vsel %vm197, %v204, %v359
        %362 = vrot.lane.b32.xlu0 %v360, 127
        %v363 = vpop.permute.xlu0 %362
        %364 = vrot.lane.b32.xlu0 %v361, 127
        %v365 = vpop.permute.xlu0 %364
        %v366 = vsel %vm197, %v203, %v363
        %v367 = vsel %vm197, %v204, %v365
        %368 = vrot.lane.b32.xlu0 %v203, 1
        %v369 = vpop.permute.xlu0 %368
        %370 = vrot.lane.b32.xlu0 %v204, 1
        %v371 = vpop.permute.xlu0 %370
        %v372 = vsel %vm196, %v203, %v369
        %v373 = vsel %vm196, %v204, %v371
        %374 = vrot.lane.b32.xlu0 %v372, 1
        %v375 = vpop.permute.xlu0 %374
        %376 = vrot.lane.b32.xlu0 %v373, 1
        %v377 = vpop.permute.xlu0 %376
        %v378 = vsel %vm196, %v203, %v375
        %v379 = vsel %vm196, %v204, %v377
        %v380 = vmul.f32 %v378, 0.006976
        %v381 = vmul.f32 %v379, 0.006976
        %v382 = vadd.f32 %v354, %v380
        %v383 = vadd.f32 %v355, %v381
        %v384 = vmul.f32 %v372, 0.0557
        %v385 = vmul.f32 %v373, 0.0557
        %v386 = vadd.f32 %v382, %v384
        %v387 = vadd.f32 %v383, %v385
        %v388 = vmul.f32 %v203, 0.110656
        %v389 = vmul.f32 %v204, 0.110656
        %v390 = vadd.f32 %v386, %v388
        %v391 = vadd.f32 %v387, %v389
        %v392 = vmul.f32 %v360, 0.0557
        %v393 = vmul.f32 %v361, 0.0557
        %v394 = vadd.f32 %v390, %v392
        %v395 = vadd.f32 %v391, %v393
        %v396 = vmul.f32 %v366, 0.006976
        %v397 = vmul.f32 %v367, 0.006976
        %v398 = vadd.f32 %v394, %v396
        %v399 = vadd.f32 %v395, %v397
        %400 = vrot.lane.b32.xlu0 %v209, 127
        %v401 = vpop.permute.xlu0 %400
        %402 = vrot.lane.b32.xlu0 %v210, 127
        %v403 = vpop.permute.xlu0 %402
        %v404 = vsel %vm197, %v209, %v401
        %v405 = vsel %vm197, %v210, %v403
        %406 = vrot.lane.b32.xlu0 %v404, 127
        %v407 = vpop.permute.xlu0 %406
        %408 = vrot.lane.b32.xlu0 %v405, 127
        %v409 = vpop.permute.xlu0 %408
        %v410 = vsel %vm197, %v209, %v407
        %v411 = vsel %vm197, %v210, %v409
        %412 = vrot.lane.b32.xlu0 %v209, 1
        %v413 = vpop.permute.xlu0 %412
        %414 = vrot.lane.b32.xlu0 %v210, 1
        %v415 = vpop.permute.xlu0 %414
        %v416 = vsel %vm196, %v209, %v413
        %v417 = vsel %vm196, %v210, %v415
        %418 = vrot.lane.b32.xlu0 %v416, 1
        %v419 = vpop.permute.xlu0 %418
        %420 = vrot.lane.b32.xlu0 %v417, 1
        %v421 = vpop.permute.xlu0 %420
        %v422 = vsel %vm196, %v209, %v419
        %v423 = vsel %vm196, %v210, %v421
        %v424 = vmul.f32 %v422, 0.000874
        %v425 = vmul.f32 %v423, 0.000874
        %v426 = vadd.f32 %v398, %v424
        %v427 = vadd.f32 %v399, %v425
        %v428 = vmul.f32 %v416, 0.006976
        %v429 = vmul.f32 %v417, 0.006976
        %v430 = vadd.f32 %v426, %v428
        %v431 = vadd.f32 %v427, %v429
        %v432 = vmul.f32 %v209, 0.01386
        %v433 = vmul.f32 %v210, 0.01386
        %v434 = vadd.f32 %v430, %v432
        %v435 = vadd.f32 %v431, %v433
        %v436 = vmul.f32 %v404, 0.006976
        %v437 = vmul.f32 %v405, 0.006976
        %v438 = vadd.f32 %v434, %v436
        %v439 = vadd.f32 %v435, %v437
        %v440 = vmul.f32 %v410, 0.000874
        %v441 = vmul.f32 %v411, 0.000874
        %v442 = vadd.f32 %v438, %v440
        %v443 = vadd.f32 %v439, %v441
        %444 = vst [vmem:[%s134] sm:$0xff] %v442
        %445 = vst [vmem:[%s134 + $0x8] sm:$0xff] %v443
        %s446 = sand.u32 %s52, 1
        %s447 = scalar_lea.sflag [#allocation4], %s446
        %s448 = sand.u32 %s52, 1
        %s449 = smul.addr %s448, 16
        %s450 = scalar_lea.vmem [#allocation5], %s449
        // Predicated region
        $region29: #{tpu_custom_call.1} parent=23 // pred_check
          %p451 = pneg %p62
        $region30: #{tpu_custom_call.1} parent=23 // pred_check_branch
          %453 = sbr.rel (%p451) target = $region32
        $region31: #{tpu_custom_call.1} parent=23 // pred_region
          %s455 = ssub.s32 256, 256
          %456 = vsyncadd %s447, %s455
          %s457 = smul.addr %s18, 2
          %s458 = smul.addr %s457, 128
          %s459 = scalar_lea.hbm %s1, %s458
          %s460 = sshll.u32 %s450, 4
          %s461 = int_to_ptr.vmem [resolvable:$true] %s460
          %466 = dma.vmem_to_hbm [thread:$0]  %s461, 256, %s459, %s447, 128, 128, 8
        $region32: #{tpu_custom_call.1} parent=23 // pred_fallthru
          _
      $region24: #{tpu_custom_call.1} parent=5 // pred_fallthru
        _
      %p467 = scmp.le.s32.totalorder 2, %s13
      // Predicated region
      $region33: #{tpu_custom_call.1} parent=5 // pred_check
        %p468 = pneg %p467
      $region34: #{tpu_custom_call.1} parent=5 // pred_check_branch
        %470 = sbr.rel (%p468) target = $region36
      $region35: #{tpu_custom_call.1} parent=5 // pred_region
        %s471 = ssub.s32 %s13, 2
        // Predicated region
        $region37: #{tpu_custom_call.1} parent=35 // pred_check
          %p472 = pneg %p68
        $region38: #{tpu_custom_call.1} parent=35 // pred_check_branch
          %474 = sbr.rel (%p472) target = $region40
        $region39: #{tpu_custom_call.1} parent=35 // pred_region
          %s475 = sand.u32 %s53, 1
          %s476 = scalar_lea.sflag [#allocation4], %s475
          %s477 = sand.u32 %s53, 1
          %s478 = smul.addr %s477, 16
          %s479 = scalar_lea.vmem [#allocation5], %s478
          %480 = dma.done %s476, 256
        $region40: #{tpu_custom_call.1} parent=35 // pred_fallthru
          _
      $region36: #{tpu_custom_call.1} parent=5 // pred_fallthru
        _
    $region6: #{tpu_custom_call.1} parent=1 // loop_footer
      %s17 = sadd.s32 1, %s13
    $region7: #{tpu_custom_call.1} parent=1 // loop_footer_branch
      %12 = sbr.rel target = $region3
    $region8: #{tpu_custom_call.1} parent=1 // loop_exit
      _
    %481 = vsyncpa [#allocation3], 1
    %s482 = scalar_lea.sflag [#allocation3], 1
    %483 = vsyncpa %s482, 1
    %484 = vsyncpa [#allocation4], 1
    %s485 = scalar_lea.sflag [#allocation4], 1
    %486 = vsyncpa %s485, 1

</llo_original>
